<compile_context>
chip_gen: v7x
topology: tpu7x:2x2x1
jax: 0.10.0
libtpu: 0.0.40
codegen_flags: <defaults>
</compile_context>

<pallas_src>
import functools

import jax
import jax.numpy as jnp
import numpy as np
from jax.experimental import pallas as pl
from jax.experimental.pallas import tpu as pltpu


def _copy_kernel(x_ref, o_ref):
    # Pure pass-through of the current (lane-dense) block. With the output
    # aliased onto the input this is effectively an in-place no-op copy.
    o_ref[...] = x_ref[...]


# Cap per-block VMEM footprint. With double-buffered input AND output blocks
# (2 x 2 x _MAX_BLOCK_BYTES = 16 MiB) this fits comfortably inside v7x's
# 64 MiB physical VMEM and well inside v5e/v6e's 128 MiB.
_MAX_BLOCK_BYTES = 4 * 1024 * 1024


def _tnet_identity_pallas(x):
    """Pallas implementation of TNet.forward (identity) on a (B, C, N) array."""
    B, C, N = x.shape
    rows, cols = B, C * N                      # lane-dense view: last dim = C*N
    x2 = x.reshape(rows, cols)                 # contiguous reshape (bitcast)

    bytes_per_row = cols * x2.dtype.itemsize
    block_rows = max(1, min(rows, _MAX_BLOCK_BYTES // max(1, bytes_per_row)))
    if block_rows < rows:
        # Sub-extent blocks must keep the sublane dim a multiple of 8.
        block_rows = min(rows, max(8, (block_rows // 8) * 8))
    grid_rows = pl.cdiv(rows, block_rows)

    y2 = pl.pallas_call(
        _copy_kernel,
        out_shape=jax.ShapeDtypeStruct((rows, cols), x2.dtype),
        grid=(grid_rows,),
        in_specs=[pl.BlockSpec((block_rows, cols), lambda i: (i, 0))],
        out_specs=pl.BlockSpec((block_rows, cols), lambda i: (i, 0)),
        input_output_aliases={0: 0},           # output aliases the input buffer
        compiler_params=pltpu.CompilerParams(
            dimension_semantics=(
                ("parallel",) if grid_rows > 1 else ("arbitrary",)
            ),
        ),
    )(x2)
    return y2.reshape(B, C, N)


@functools.partial(jax.jit, donate_argnums=(0,))
def tnet_forward(x):
    """TNet.forward(x) == x, with the input buffer donated so the aliased
    Pallas identity produces no extra HBM allocation or traffic."""
    return _tnet_identity_pallas(x)


if __name__ == "__main__":
    key = jax.random.PRNGKey(0)
    # PointNet-style TNet input: batch=2, channels=k=64, num_points=128.
    B, C, N = 2, 64, 128
    x = jax.random.normal(key, (B, C, N), dtype=jnp.float32)

    # Keep a host copy for the correctness check, since x's device buffer is
    # donated to the kernel.
    x_host = np.asarray(jax.device_get(x))

    y = tnet_forward(x)
    y = jax.block_until_ready(y)

    y_host = np.asarray(jax.device_get(y))
    assert y_host.shape == x_host.shape and y_host.dtype == x_host.dtype
    assert np.array_equal(y_host, x_host)
    print("KERNEL_OK")
</pallas_src>

<mosaic_0001>
module attributes {stable_mosaic.version = 11 : i64} {
  func.func @_copy_kernel(%arg0: i32, %arg1: memref<2x8192xf32, #tpu.memory_space<vmem>>, %arg2: memref<2x8192xf32, #tpu.memory_space<vmem>>) attributes {dimension_semantics = [#tpu.dimension_semantics<arbitrary>], iteration_bounds = array<i64: 1>, scalar_prefetch = 0 : i64, scratch_operands = 0 : i64, tpu.core_type = #tpu.core_type<tc>, window_params = [{transform_indices = @transform_0, window_bounds = array<i64: 2, 8192>}, {transform_indices = @transform_1, window_bounds = array<i64: 2, 8192>}]} {
    %c0 = arith.constant 0 : index
    %c0_0 = arith.constant 0 : index
    %0 = vector.load %arg1[%c0, %c0_0] : memref<2x8192xf32, #tpu.memory_space<vmem>>, vector<2x8192xf32>
    %c0_1 = arith.constant 0 : index
    %c0_2 = arith.constant 0 : index
    %1 = vector.load %arg2[%c0_1, %c0_2] : memref<2x8192xf32, #tpu.memory_space<vmem>>, vector<2x8192xf32>
    tpu.vector_store %arg2[%c0_1, %c0_2], %0 {strides = array<i32>} : memref<2x8192xf32, #tpu.memory_space<vmem>>, vector<2x8192xf32>,
    return
  }
  func.func @transform_0(%arg0: i32) -> (i32, i32) {
    %c0_i32 = arith.constant 0 : i32
    %c0_i32_0 = arith.constant 0 : i32
    return %arg0, %c0_i32 : i32, i32
  }
  func.func @transform_1(%arg0: i32) -> (i32, i32) {
    %c0_i32 = arith.constant 0 : i32
    %c0_i32_0 = arith.constant 0 : i32
    return %arg0, %c0_i32 : i32, i32
  }
}

</mosaic_0001>

<llo_original>
// kernel: tnet_forward.1
$region0: #{tnet_forward.1}
  #allocation0 [shape = 'u32[]', space=smem, size = 0x4, offset = 0x4, fixed_abs, tag = 'smem constant byte address 0x4 - core index']
  #allocation1 [shape = 'u32[144,128]{1,0:T(1,128)}', space=vmem, size = 0x12000, scoped, tag = 'internal scratch']
  %s0 = inlined_call_operand.vmem [shape: f32[2,8192], index: 0, kind: input, shape index: {}, may-alias: {0,1}]
  %s1 = inlined_call_operand.vmem [shape: f32[2,8192], index: 1, kind: output, shape index: {}, may-alias: {0,1}]
  %s2 = sld [smem:[#allocation0]]
  $region14: #{tnet_forward.1} parent=0
    _
  %s4 = ssub.s32 1, %s2
  %s5 = scalar_select 0, %s4, %s2
  // Predicated region
  $region2: #{tnet_forward.1} parent=0 // pred_check
    _
  $region3: #{tnet_forward.1} parent=0 // pred_check_branch
    %7 = sbr.rel (0) target = $region5
  $region4: #{tnet_forward.1} parent=0 // pred_region
    _
  $region5: #{tnet_forward.1} parent=0 // pred_fallthru
    _
  %v8 = vld [vmem:[%s0] sm:$0xff]
  %v9 = vld [vmem:[%s0 + $0x8] sm:$0xff]
  %v10 = vld [vmem:[%s0 + $0x10] sm:$0xff]
  %v11 = vld [vmem:[%s0 + $0x18] sm:$0xff]
  %v12 = vld [vmem:[%s0 + $0x20] sm:$0xff]
  %v13 = vld [vmem:[%s0 + $0x28] sm:$0xff]
  %v14 = vld [vmem:[%s0 + $0x30] sm:$0xff]
  %v15 = vld [vmem:[%s0 + $0x38] sm:$0xff]
  %v16 = vld [vmem:[%s0 + $0x40] sm:$0xff]
  %v17 = vld [vmem:[%s0 + $0x48] sm:$0xff]
  %v18 = vld [vmem:[%s0 + $0x50] sm:$0xff]
  %v19 = vld [vmem:[%s0 + $0x58] sm:$0xff]
  %v20 = vld [vmem:[%s0 + $0x60] sm:$0xff]
  %v21 = vld [vmem:[%s0 + $0x68] sm:$0xff]
  %v22 = vld [vmem:[%s0 + $0x70] sm:$0xff]
  %v23 = vld [vmem:[%s0 + $0x78] sm:$0xff]
  %24 = vst [vmem:[%s1] sm:$0xff] %v8
  %25 = vst [vmem:[%s1 + $0x8] sm:$0xff] %v9
  %26 = vst [vmem:[%s1 + $0x10] sm:$0xff] %v10
  %27 = vst [vmem:[%s1 + $0x18] sm:$0xff] %v11
  %28 = vst [vmem:[%s1 + $0x20] sm:$0xff] %v12
  %29 = vst [vmem:[%s1 + $0x28] sm:$0xff] %v13
  %30 = vst [vmem:[%s1 + $0x30] sm:$0xff] %v14
  %31 = vst [vmem:[%s1 + $0x38] sm:$0xff] %v15
  %32 = vst [vmem:[%s1 + $0x40] sm:$0xff] %v16
  %33 = vst [vmem:[%s1 + $0x48] sm:$0xff] %v17
  %34 = vst [vmem:[%s1 + $0x50] sm:$0xff] %v18
  %35 = vst [vmem:[%s1 + $0x58] sm:$0xff] %v19
  %36 = vst [vmem:[%s1 + $0x60] sm:$0xff] %v20
  %37 = vst [vmem:[%s1 + $0x68] sm:$0xff] %v21
  %38 = vst [vmem:[%s1 + $0x70] sm:$0xff] %v22
  %39 = vst [vmem:[%s1 + $0x78] sm:$0xff] %v23
  // Predicated region
  $region6: #{tnet_forward.1} parent=0 // pred_check
    _
  $region7: #{tnet_forward.1} parent=0 // pred_check_branch
    %41 = sbr.rel (0) target = $region9
  $region8: #{tnet_forward.1} parent=0 // pred_region
    _
  $region9: #{tnet_forward.1} parent=0 // pred_fallthru
    _
  // Predicated region
  $region10: #{tnet_forward.1} parent=0 // pred_check
    _
  $region11: #{tnet_forward.1} parent=0 // pred_check_branch
    %43 = sbr.rel (0) target = $region13
  $region12: #{tnet_forward.1} parent=0 // pred_region
    _
  $region13: #{tnet_forward.1} parent=0 // pred_fallthru
    _

</llo_original>
